<compile_context>
chip_gen: v7x
topology: tpu7x:2x2x1
jax: 0.10.0
libtpu: 0.0.40
codegen_flags: <defaults>
</compile_context>

<pallas_src>
import jax
import jax.numpy as jnp
from jax.experimental import pallas as pl
from jax.experimental.pallas import tpu as pltpu


LANE = 128      # TPU lane width: params + final output padded lane-dense
SUBLANE = 8     # TPU sublane width (f32)


def _round_up(v, m):
    return -(-v // m) * m


# ----------------------------------------------------------------------------
# Fused per-graph kernel: all GRGC layers + masked SumReadout + MLP + sigmoid.
#   per layer: h <- relu( [A_0@h | ... | A_{R-1}@h | h] @ [Wl;Ws] + (bl+bs) )
#   then:      out <- sigmoid( (mask @ h) @ Wmlp + bmlp )   (lane-padded slab)
# ----------------------------------------------------------------------------
def _make_gearnet_kernel(num_relation, npg_pad, layer_meta, mlp_meta):
    R, N = num_relation, npg_pad
    dlast, mlp_w_off, mlp_b_off = mlp_meta

    def kernel(a_ref, x_ref, m_ref, p_ref, o_ref):
        a = a_ref[0]                                  # (R*N, N)  this graph
        h = x_ref[0]                                  # (N, D0)
        for (din, dout, w_off, w_rows, b_off) in layer_meta:
            # Relational message gather for ALL relations: ONE MXU matmul.
            #   ax[r*N + n, d] = sum_m A[r, n, m] * h[m, d]
            ax = jnp.dot(a, h, preferred_element_type=jnp.float32)   # (R*N, din)
            # Lane-concat the R relation blocks + self-loop features so the
            # whole relational linear + self-loop linear is ONE dot with
            # K = (R+1)*din against the host-packed weight [Wl_0;...;Wl_R-1;Ws].
            cat = jnp.concatenate(
                [ax[r * N:(r + 1) * N, :] for r in range(R)] + [h], axis=-1)
            w = p_ref[w_off:w_off + w_rows, 0:dout]   # ((R+1)*din, dout)
            b = p_ref[b_off:b_off + 1, 0:dout]        # (1, dout)  = bl + bs
            # ReLU; short_cut=False, batch_norm=False, dropout = identity (eval).
            h = jnp.maximum(
                jnp.dot(cat, w, preferred_element_type=jnp.float32) + b, 0.0)

        # Masked SumReadout (node -> graph) + MLP + sigmoid.
        g = jnp.dot(m_ref[0], h, preferred_element_type=jnp.float32)   # (1, dlast)
        wm = p_ref[mlp_w_off:mlp_w_off + dlast, :]    # (dlast, 128) zero-padded
        bm = p_ref[mlp_b_off:mlp_b_off + 1, :]        # (1, 128)
        logits = jnp.dot(g, wm, preferred_element_type=jnp.float32) + bm
        # Lane-dense (8, 128) unmasked store; real (1, n_out) sliced outside.
        o_ref[0] = jnp.broadcast_to(jax.nn.sigmoid(logits),
                                    (SUBLANE, LANE)).astype(o_ref.dtype)

    return kernel


def gearnet_forward(A_pg, x_pg, node_mask, layer_params, mlp_params):
    """Full GearNet forward, one fused pallas_call gridded over graphs.

    A_pg: (G, R, Npg, Npg) per-graph relational adjacency, A[g, r, dst, src].
    x_pg: (G, Npg, input_dim) per-graph node features.
    node_mask: (G, Npg) 1.0 for real nodes (SumReadout weights).
    layer_params: list of (Wl (R, Din, Dout), bl (1, Dout), Ws (Din, Dout), bs (1, Dout)).
    mlp_params: (Wmlp (Dlast, n_out), bmlp (1, n_out)).
    Returns (G, n_out) float32.
    """
    G, R, Npg, _ = A_pg.shape
    D0 = x_pg.shape[-1]
    Np = _round_up(Npg, SUBLANE)       # sublane-aligned nodes per graph

    # --- host-side prep: per-graph padded blocks (tiny zero-pads, free) ---
    a_in = jnp.zeros((G, R, Np, Np), jnp.float32).at[:, :, :Npg, :Npg].set(A_pg)
    a_in = a_in.reshape(G, R * Np, Np)
    x_in = jnp.zeros((G, Np, D0), jnp.float32).at[:, :Npg, :].set(x_pg)
    m_in = jnp.zeros((G, 1, Np), jnp.float32).at[:, 0, :Npg].set(node_mask)

    # --- pack ALL parameters into ONE (rows, 128) buffer => a single DMA ---
    blocks, cur = [], 0

    def place(mat):
        nonlocal cur
        r, c = mat.shape
        rp = _round_up(r, SUBLANE)
        blocks.append(jnp.zeros((rp, LANE), jnp.float32)
                      .at[:r, :c].set(mat.astype(jnp.float32)))
        off = cur
        cur += rp
        return off

    layer_meta = []
    for (Wl, bl, Ws, bs) in layer_params:
        din, dout = Ws.shape
        # [Wl_0; ...; Wl_{R-1}; Ws] so relational + self-loop linear is one dot.
        w_aug = jnp.concatenate([Wl.reshape(R * din, dout), Ws], axis=0)
        w_off = place(w_aug)
        b_off = place(bl + bs)                         # biases folded once on host
        layer_meta.append((din, dout, w_off, (R + 1) * din, b_off))

    Wmlp, bmlp = mlp_params
    dlast, n_out = Wmlp.shape
    mlp_w_off = place(Wmlp)                            # lane-padded to 128 inside place
    mlp_b_off = place(bmlp)
    params = jnp.concatenate(blocks, axis=0)           # (total_rows, 128)

    kernel = _make_gearnet_kernel(R, Np, tuple(layer_meta),
                                  (dlast, mlp_w_off, mlp_b_off))

    out = pl.pallas_call(
        kernel,
        out_shape=jax.ShapeDtypeStruct((G, SUBLANE, LANE), jnp.float32),
        grid=(G,),
        in_specs=[
            pl.BlockSpec((1, R * Np, Np), lambda g: (g, 0, 0)),   # A block / graph
            pl.BlockSpec((1, Np, D0), lambda g: (g, 0, 0)),       # x block / graph
            pl.BlockSpec((1, 1, Np), lambda g: (g, 0, 0)),        # readout mask
            pl.BlockSpec(params.shape, lambda g: (0, 0)),         # shared params (1 DMA)
        ],
        out_specs=pl.BlockSpec((1, SUBLANE, LANE), lambda g: (g, 0, 0)),
        compiler_params=pltpu.CompilerParams(
            dimension_semantics=("parallel",)),        # shard graphs across TCs (v7x)
    )(a_in, x_in, m_in, params)
    return out[:, 0, :n_out]


# ----------------------------------------------------------------------------
# Pure-JAX reference (for correctness check only).
# ----------------------------------------------------------------------------
def ref_forward(A_pg, x_pg, node_mask, layer_params, mlp_params):
    h = x_pg
    for (Wl, bl, Ws, bs) in layer_params:
        upd = jnp.einsum("grnm,gmd->grnd", A_pg, h)
        out = (jnp.einsum("grnd,rde->gne", upd, Wl) + bl
               + jnp.einsum("gnd,de->gne", h, Ws) + bs)
        h = jnp.maximum(out, 0.0)
    g = jnp.einsum("gn,gnd->gd", node_mask, h)
    Wmlp, bmlp = mlp_params
    return jax.nn.sigmoid(g @ Wmlp + bmlp)


if __name__ == "__main__":
    key = jax.random.PRNGKey(0)

    # ---- model config (GearNet(input_dim=8, hidden_dims=[16,16], num_relation=4)) ----
    input_dim = 8
    hidden_dims = [16, 16]
    num_relation = 4
    dims = [input_dim] + hidden_dims

    # ---- synthetic graph batch: 2 graphs, 8 nodes each ----
    num_graphs = 2
    nodes_per_graph = 8
    edges_per_graph = 24

    keys = jax.random.split(key, 12)
    src = jax.random.randint(keys[0], (num_graphs, edges_per_graph), 0, nodes_per_graph)
    dst = jax.random.randint(keys[1], (num_graphs, edges_per_graph), 0, nodes_per_graph)
    rel = jax.random.randint(keys[2], (num_graphs, edges_per_graph), 0, num_relation)
    ew = jax.random.uniform(keys[3], (num_graphs, edges_per_graph), jnp.float32, 0.5, 1.5)

    # Dense per-graph weighted relational adjacency A[g, r, dst, src]
    # (replaces torchdrug's scatter_add message aggregation).
    A_pg = jnp.zeros((num_graphs, num_relation, nodes_per_graph, nodes_per_graph),
                     jnp.float32)
    gidx = jnp.repeat(jnp.arange(num_graphs)[:, None], edges_per_graph, axis=1)
    A_pg = A_pg.at[gidx, rel, dst, src].add(ew)

    # ---- input node features + readout mask (all nodes real here) ----
    x_pg = jax.random.normal(keys[4], (num_graphs, nodes_per_graph, input_dim),
                             jnp.float32)
    node_mask = jnp.ones((num_graphs, nodes_per_graph), jnp.float32)

    # ---- deterministic parameter init ----
    layer_params = []
    pk = jax.random.split(keys[5], len(dims) - 1)
    for i in range(len(dims) - 1):
        d_in, d_out = dims[i], dims[i + 1]
        k1, k2, k3, k4 = jax.random.split(pk[i], 4)
        # nn.Linear(num_relation*d_in, d_out) -> per-relation (R, d_in, d_out)
        Wl = 0.1 * jax.random.normal(k1, (num_relation, d_in, d_out), jnp.float32)
        bl = 0.1 * jax.random.normal(k2, (1, d_out), jnp.float32)
        # self_loop = nn.Linear(d_in, d_out): weight transposed to (d_in, d_out)
        Ws = 0.1 * jax.random.normal(k3, (d_in, d_out), jnp.float32)
        bs = 0.1 * jax.random.normal(k4, (1, d_out), jnp.float32)
        layer_params.append((Wl, bl, Ws, bs))

    k1, k2 = jax.random.split(keys[6], 2)
    Wmlp = 0.1 * jax.random.normal(k1, (hidden_dims[-1], 3), jnp.float32)  # MLP(hidden[-1], 3)
    bmlp = 0.1 * jax.random.normal(k2, (1, 3), jnp.float32)
    mlp_params = (Wmlp, bmlp)

    # ---- run fused Pallas forward ----
    fwd = jax.jit(gearnet_forward)
    out = jax.block_until_ready(fwd(A_pg, x_pg, node_mask, layer_params, mlp_params))

    # ---- correctness check vs. pure-JAX reference ----
    ref = ref_forward(A_pg, x_pg, node_mask, layer_params, mlp_params)
    assert out.shape == (num_graphs, 3)
    assert jnp.allclose(out, ref, atol=1e-5, rtol=1e-5), (out, ref)

    print("KERNEL_OK")
</pallas_src>

<mosaic_0001>
module attributes {stable_mosaic.version = 11 : i64} {
  func.func @kernel(%arg0: i32, %arg1: memref<1x32x8xf32, #tpu.memory_space<vmem>>, %arg2: memref<1x8x8xf32, #tpu.memory_space<vmem>>, %arg3: memref<1x1x8xf32, #tpu.memory_space<vmem>>, %arg4: memref<160x128xf32, #tpu.memory_space<vmem>>, %arg5: memref<1x8x128xf32, #tpu.memory_space<vmem>>) attributes {dimension_semantics = [#tpu.dimension_semantics<parallel>], iteration_bounds = array<i64: 2>, scalar_prefetch = 0 : i64, scratch_operands = 0 : i64, tpu.core_type = #tpu.core_type<tc>, window_params = [{transform_indices = @transform_0, window_bounds = array<i64: 1, 32, 8>}, {transform_indices = @transform_1, window_bounds = array<i64: 1, 8, 8>}, {transform_indices = @transform_2, window_bounds = array<i64: 1, 1, 8>}, {pipeline_mode = #tpu.pipeline_mode<synchronous>, transform_indices = @transform_3, window_bounds = array<i64: 160, 128>}, {transform_indices = @transform_4, window_bounds = array<i64: 1, 8, 128>}]} {
    %c0 = arith.constant 0 : index
    %c0_0 = arith.constant 0 : index
    %c0_1 = arith.constant 0 : index
    %0 = vector.load %arg1[%c0, %c0_0, %c0_1] : memref<1x32x8xf32, #tpu.memory_space<vmem>>, vector<1x32x8xf32>
    %1 = vector.shape_cast %0 : vector<1x32x8xf32> to vector<32x8xf32>
    %c0_2 = arith.constant 0 : index
    %c0_3 = arith.constant 0 : index
    %c0_4 = arith.constant 0 : index
    %2 = vector.load %arg2[%c0_2, %c0_3, %c0_4] : memref<1x8x8xf32, #tpu.memory_space<vmem>>, vector<1x8x8xf32>
    %3 = vector.shape_cast %2 : vector<1x8x8xf32> to vector<8x8xf32>
    %cst = arith.constant dense<0.000000e+00> : vector<32x8xf32>
    %4 = tpu.matmul %1, %3, %cst {dimension_numbers = #tpu.dot_dimension_numbers<[1], [0], [0], [1], [0, 0, 1, 1], [], []>} : vector<32x8xf32>, vector<8x8xf32>, vector<32x8xf32> -> vector<32x8xf32>
    %5 = vector.extract_strided_slice %4 {offsets = [0, 0], sizes = [8, 8], strides = [1, 1]} : vector<32x8xf32> to vector<8x8xf32>
    %6 = vector.extract_strided_slice %4 {offsets = [8, 0], sizes = [8, 8], strides = [1, 1]} : vector<32x8xf32> to vector<8x8xf32>
    %7 = vector.extract_strided_slice %4 {offsets = [16, 0], sizes = [8, 8], strides = [1, 1]} : vector<32x8xf32> to vector<8x8xf32>
    %8 = vector.extract_strided_slice %4 {offsets = [24, 0], sizes = [8, 8], strides = [1, 1]} : vector<32x8xf32> to vector<8x8xf32>
    %9 = tpu.concatenate %5, %6, %7, %8, %3 in 1 : vector<8x8xf32>, vector<8x8xf32>, vector<8x8xf32>, vector<8x8xf32>, vector<8x8xf32> -> vector<8x40xf32>
    %c0_5 = arith.constant 0 : index
    %c0_6 = arith.constant 0 : index
    %10 = vector.load %arg4[%c0_5, %c0_6] : memref<160x128xf32, #tpu.memory_space<vmem>>, vector<40x16xf32>
    %c40 = arith.constant 40 : index
    %c0_7 = arith.constant 0 : index
    %11 = vector.load %arg4[%c40, %c0_7] : memref<160x128xf32, #tpu.memory_space<vmem>>, vector<1x16xf32>
    %cst_8 = arith.constant dense<0.000000e+00> : vector<8x16xf32>
    %12 = tpu.matmul %9, %10, %cst_8 {dimension_numbers = #tpu.dot_dimension_numbers<[1], [0], [0], [1], [0, 0, 1, 1], [], []>} : vector<8x40xf32>, vector<40x16xf32>, vector<8x16xf32> -> vector<8x16xf32>
    %13 = vector.broadcast %11 : vector<1x16xf32> to vector<8x16xf32>
    %14 = arith.addf %12, %13 : vector<8x16xf32>
    %cst_9 = arith.constant 0.000000e+00 : f32
    %15 = vector.broadcast %cst_9 : f32 to vector<8x16xf32>
    %16 = arith.maximumf %14, %15 : vector<8x16xf32>
    %cst_10 = arith.constant dense<0.000000e+00> : vector<32x16xf32>
    %17 = tpu.matmul %1, %16, %cst_10 {dimension_numbers = #tpu.dot_dimension_numbers<[1], [0], [0], [1], [0, 0, 1, 1], [], []>} : vector<32x8xf32>, vector<8x16xf32>, vector<32x16xf32> -> vector<32x16xf32>
    %18 = vector.extract_strided_slice %17 {offsets = [0, 0], sizes = [8, 16], strides = [1, 1]} : vector<32x16xf32> to vector<8x16xf32>
    %19 = vector.extract_strided_slice %17 {offsets = [8, 0], sizes = [8, 16], strides = [1, 1]} : vector<32x16xf32> to vector<8x16xf32>
    %20 = vector.extract_strided_slice %17 {offsets = [16, 0], sizes = [8, 16], strides = [1, 1]} : vector<32x16xf32> to vector<8x16xf32>
    %21 = vector.extract_strided_slice %17 {offsets = [24, 0], sizes = [8, 16], strides = [1, 1]} : vector<32x16xf32> to vector<8x16xf32>
    %22 = tpu.concatenate %18, %19, %20, %21, %16 in 1 : vector<8x16xf32>, vector<8x16xf32>, vector<8x16xf32>, vector<8x16xf32>, vector<8x16xf32> -> vector<8x80xf32>
    %c48 = arith.constant 48 : index
    %c0_11 = arith.constant 0 : index
    %23 = vector.load %arg4[%c48, %c0_11] : memref<160x128xf32, #tpu.memory_space<vmem>>, vector<80x16xf32>
    %c128 = arith.constant 128 : index
    %c0_12 = arith.constant 0 : index
    %24 = vector.load %arg4[%c128, %c0_12] : memref<160x128xf32, #tpu.memory_space<vmem>>, vector<1x16xf32>
    %cst_13 = arith.constant dense<0.000000e+00> : vector<8x16xf32>
    %25 = tpu.matmul %22, %23, %cst_13 {dimension_numbers = #tpu.dot_dimension_numbers<[1], [0], [0], [1], [0, 0, 1, 1], [], []>} : vector<8x80xf32>, vector<80x16xf32>, vector<8x16xf32> -> vector<8x16xf32>
    %26 = vector.broadcast %24 : vector<1x16xf32> to vector<8x16xf32>
    %27 = arith.addf %25, %26 : vector<8x16xf32>
    %cst_14 = arith.constant 0.000000e+00 : f32
    %28 = vector.broadcast %cst_14 : f32 to vector<8x16xf32>
    %29 = arith.maximumf %27, %28 : vector<8x16xf32>
    %c0_15 = arith.constant 0 : index
    %c0_16 = arith.constant 0 : index
    %c0_17 = arith.constant 0 : index
    %30 = vector.load %arg3[%c0_15, %c0_16, %c0_17] : memref<1x1x8xf32, #tpu.memory_space<vmem>>, vector<1x1x8xf32>
    %31 = vector.shape_cast %30 : vector<1x1x8xf32> to vector<1x8xf32>
    %cst_18 = arith.constant dense<0.000000e+00> : vector<1x16xf32>
    %32 = tpu.matmul %31, %29, %cst_18 {dimension_numbers = #tpu.dot_dimension_numbers<[1], [0], [0], [1], [0, 0, 1, 1], [], []>} : vector<1x8xf32>, vector<8x16xf32>, vector<1x16xf32> -> vector<1x16xf32>
    %c136 = arith.constant 136 : index
    %c0_19 = arith.constant 0 : index
    %33 = vector.load %arg4[%c136, %c0_19] : memref<160x128xf32, #tpu.memory_space<vmem>>, vector<16x128xf32>
    %c152 = arith.constant 152 : index
    %c0_20 = arith.constant 0 : index
    %34 = vector.load %arg4[%c152, %c0_20] : memref<160x128xf32, #tpu.memory_space<vmem>>, vector<1x128xf32>
    %cst_21 = arith.constant dense<0.000000e+00> : vector<1x128xf32>
    %35 = tpu.matmul %32, %33, %cst_21 {dimension_numbers = #tpu.dot_dimension_numbers<[1], [0], [0], [1], [0, 0, 1, 1], [], []>} : vector<1x16xf32>, vector<16x128xf32>, vector<1x128xf32> -> vector<1x128xf32>
    %36 = arith.addf %35, %34 : vector<1x128xf32>
    %37 = arith.negf %36 : vector<1x128xf32>
    %38 = math.exp %37 : vector<1x128xf32>
    %cst_22 = arith.constant 1.000000e+00 : f32
    %39 = vector.broadcast %cst_22 : f32 to vector<1x128xf32>
    %40 = arith.addf %39, %38 : vector<1x128xf32>
    %41 = arith.divf %39, %40 : vector<1x128xf32>
    %42 = vector.shape_cast %41 : vector<1x128xf32> to vector<1x128xf32>
    %43 = vector.broadcast %42 : vector<1x128xf32> to vector<8x128xf32>
    %c0_23 = arith.constant 0 : index
    %c0_24 = arith.constant 0 : index
    %c0_25 = arith.constant 0 : index
    %44 = vector.load %arg5[%c0_23, %c0_24, %c0_25] : memref<1x8x128xf32, #tpu.memory_space<vmem>>, vector<1x8x128xf32>
    %45 = vector.shape_cast %44 : vector<1x8x128xf32> to vector<8x128xf32>
    %46 = vector.shape_cast %43 : vector<8x128xf32> to vector<1x8x128xf32>
    tpu.vector_store %arg5[%c0_23, %c0_24, %c0_25], %46 {strides = array<i32>} : memref<1x8x128xf32, #tpu.memory_space<vmem>>, vector<1x8x128xf32>,
    return
  }
  func.func @transform_0(%arg0: i32) -> (i32, i32, i32) {
    %c0_i32 = arith.constant 0 : i32
    %c0_i32_0 = arith.constant 0 : i32
    %c0_i32_1 = arith.constant 0 : i32
    return %arg0, %c0_i32, %c0_i32_0 : i32, i32, i32
  }
  func.func @transform_1(%arg0: i32) -> (i32, i32, i32) {
    %c0_i32 = arith.constant 0 : i32
    %c0_i32_0 = arith.constant 0 : i32
    %c0_i32_1 = arith.constant 0 : i32
    return %arg0, %c0_i32, %c0_i32_0 : i32, i32, i32
  }
  func.func @transform_2(%arg0: i32) -> (i32, i32, i32) {
    %c0_i32 = arith.constant 0 : i32
    %c0_i32_0 = arith.constant 0 : i32
    %c0_i32_1 = arith.constant 0 : i32
    return %arg0, %c0_i32, %c0_i32_0 : i32, i32, i32
  }
  func.func @transform_3(%arg0: i32) -> (i32, i32) {
    %c0_i32 = arith.constant 0 : i32
    %c0_i32_0 = arith.constant 0 : i32
    %c0_i32_1 = arith.constant 0 : i32
    return %c0_i32, %c0_i32_0 : i32, i32
  }
  func.func @transform_4(%arg0: i32) -> (i32, i32, i32) {
    %c0_i32 = arith.constant 0 : i32
    %c0_i32_0 = arith.constant 0 : i32
    %c0_i32_1 = arith.constant 0 : i32
    return %arg0, %c0_i32, %c0_i32_0 : i32, i32, i32
  }
}

</mosaic_0001>

<llo_original>
// kernel: gearnet_forward.1
$region0: #{gearnet_forward.1}
  #allocation0 [shape = 'u32[]', space=smem, size = 0x4, offset = 0x4, fixed_abs, tag = 'smem constant byte address 0x4 - core index']
  #allocation1 [shape = 'u32[144,128]{1,0:T(1,128)}', space=vmem, size = 0x12000, scoped, tag = 'internal scratch']
  %s0 = inlined_call_operand.vmem [shape: f32[2,32,8], index: 0, kind: input, shape index: {}]
  %s1 = inlined_call_operand.vmem [shape: f32[2,8,8], index: 1, kind: input, shape index: {}]
  %s2 = inlined_call_operand.vmem [shape: f32[2,1,8], index: 2, kind: input, shape index: {}]
  %s3 = inlined_call_operand.vmem [shape: f32[160,128], index: 3, kind: input, shape index: {}]
  %s4 = inlined_call_operand.vmem [shape: f32[2,8,128], index: 4, kind: output, shape index: {}]
  %s5 = sld [smem:[#allocation0]]
  $region49: #{gearnet_forward.1} parent=0
    _
  %s7 = ssub.s32 1, %s5
  %s8 = scalar_select 0, %s7, %s5
  loop: start=0, step=1, limit=4
  $region2: #{gearnet_forward.1} parent=0 // loop_pre_header
    _
  $region3: #{gearnet_forward.1} parent=0 // loop_header
    %s10 = sphi 0, %s14
    %p11 = scmp.ge.s32.totalorder %s10, 4
    %s20 = sphi 0, %s22
    %s23 = sphi 0, %s20
    %s24 = sphi 0, %s23
    %s40 = sphi 0, %s24
    %s46 = sphi 0, %s48
    %s49 = sphi 0, %s46
    %s50 = sphi 0, %s49
    %s66 = sphi 0, %s50
    %s72 = sphi 0, %s74
    %s75 = sphi 0, %s72
    %s76 = sphi 0, %s75
    %s92 = sphi 0, %s76
    %s96 = sphi 0, %s96
    %s98 = sphi 0, %s96
    %s99 = sphi 0, %s98
    %s113 = sphi 0, %s99
    %s119 = sphi 0, %s121
    %s122 = sphi 0, %s119
    %s123 = sphi 0, %s122
    %s139 = sphi 0, %s123
  $region4: #{gearnet_forward.1} parent=0 // loop_header_branch
    %13 = sbr.rel (%p11) target = $region8
  $region5: #{gearnet_forward.1} parent=0 // loop_body
    %s15 = ssub.s32 %s10, 1
    %s16 = ssub.s32 %s10, 2
    %s17 = sadd.s32 %s10, 1
    %s18 = ssub.s32 %s10, %s17
    %p19 = scmp.eq.s32.totalorder %s18, 0
    %s21 = sadd.s32 %s20, 1
    %s22 = scalar_select %p19, %s20, %s21
    %p25 = pneg %p19
    %p26 = scmp.eq.s32.totalorder %s10, 1
    %p27 = por %p25, %p26
    %p28 = scmp.ne.s32.totalorder %s20, %s23
    %p29 = scmp.eq.s32.totalorder %s10, 0
    %p30 = por %p28, %p29
    %p31 = scmp.ne.s32.totalorder %s20, %s23
    %p32 = scmp.eq.s32.totalorder %s15, 1
    %p33 = por %p31, %p32
    %p34 = scmp.ne.s32.totalorder %s23, %s24
    %p35 = scmp.eq.s32.totalorder %s15, 0
    %p36 = por %p34, %p35
    %p37 = scmp.ne.s32.totalorder %s23, %s24
    %p38 = scmp.eq.s32.totalorder %s16, 1
    %p39 = por %p37, %p38
    %p41 = scmp.ne.s32.totalorder %s24, %s40
    %p42 = scmp.eq.s32.totalorder %s16, 0
    %p43 = por %p41, %p42
    %s44 = ssub.s32 %s10, %s17
    %p45 = scmp.eq.s32.totalorder %s44, 0
    %s47 = sadd.s32 %s46, 1
    %s48 = scalar_select %p45, %s46, %s47
    %p51 = pneg %p45
    %p52 = scmp.eq.s32.totalorder %s10, 1
    %p53 = por %p51, %p52
    %p54 = scmp.ne.s32.totalorder %s46, %s49
    %p55 = scmp.eq.s32.totalorder %s10, 0
    %p56 = por %p54, %p55
    %p57 = scmp.ne.s32.totalorder %s46, %s49
    %p58 = scmp.eq.s32.totalorder %s15, 1
    %p59 = por %p57, %p58
    %p60 = scmp.ne.s32.totalorder %s49, %s50
    %p61 = scmp.eq.s32.totalorder %s15, 0
    %p62 = por %p60, %p61
    %p63 = scmp.ne.s32.totalorder %s49, %s50
    %p64 = scmp.eq.s32.totalorder %s16, 1
    %p65 = por %p63, %p64
    %p67 = scmp.ne.s32.totalorder %s50, %s66
    %p68 = scmp.eq.s32.totalorder %s16, 0
    %p69 = por %p67, %p68
    %s70 = ssub.s32 %s10, %s17
    %p71 = scmp.eq.s32.totalorder %s70, 0
    %s73 = sadd.s32 %s72, 1
    %s74 = scalar_select %p71, %s72, %s73
    %p77 = pneg %p71
    %p78 = scmp.eq.s32.totalorder %s10, 1
    %p79 = por %p77, %p78
    %p80 = scmp.ne.s32.totalorder %s72, %s75
    %p81 = scmp.eq.s32.totalorder %s10, 0
    %p82 = por %p80, %p81
    %p83 = scmp.ne.s32.totalorder %s72, %s75
    %p84 = scmp.eq.s32.totalorder %s15, 1
    %p85 = por %p83, %p84
    %p86 = scmp.ne.s32.totalorder %s75, %s76
    %p87 = scmp.eq.s32.totalorder %s15, 0
    %p88 = por %p86, %p87
    %p89 = scmp.ne.s32.totalorder %s75, %s76
    %p90 = scmp.eq.s32.totalorder %s16, 1
    %p91 = por %p89, %p90
    %p93 = scmp.ne.s32.totalorder %s76, %s92
    %p94 = scmp.eq.s32.totalorder %s16, 0
    %p95 = por %p93, %p94
    %s97 = sadd.s32 %s96, 1
    %p100 = scmp.eq.s32.totalorder %s10, 1
    %p101 = scmp.ne.s32.totalorder %s96, %s98
    %p102 = scmp.eq.s32.totalorder %s10, 0
    %p103 = por %p101, %p102
    %p104 = scmp.ne.s32.totalorder %s96, %s98
    %p105 = scmp.eq.s32.totalorder %s15, 1
    %p106 = por %p104, %p105
    %p107 = scmp.ne.s32.totalorder %s98, %s99
    %p108 = scmp.eq.s32.totalorder %s15, 0
    %p109 = por %p107, %p108
    %p110 = scmp.ne.s32.totalorder %s98, %s99
    %p111 = scmp.eq.s32.totalorder %s16, 1
    %p112 = por %p110, %p111
    %p114 = scmp.ne.s32.totalorder %s99, %s113
    %p115 = scmp.eq.s32.totalorder %s16, 0
    %p116 = por %p114, %p115
    %s117 = ssub.s32 %s10, %s17
    %p118 = scmp.eq.s32.totalorder %s117, 0
    %s120 = sadd.s32 %s119, 1
    %s121 = scalar_select %p118, %s119, %s120
    %p124 = pneg %p118
    %p125 = scmp.eq.s32.totalorder %s10, 1
    %p126 = por %p124, %p125
    %p127 = scmp.ne.s32.totalorder %s119, %s122
    %p128 = scmp.eq.s32.totalorder %s10, 0
    %p129 = por %p127, %p128
    %p130 = scmp.ne.s32.totalorder %s119, %s122
    %p131 = scmp.eq.s32.totalorder %s15, 1
    %p132 = por %p130, %p131
    %p133 = scmp.ne.s32.totalorder %s122, %s123
    %p134 = scmp.eq.s32.totalorder %s15, 0
    %p135 = por %p133, %p134
    %p136 = scmp.ne.s32.totalorder %s122, %s123
    %p137 = scmp.eq.s32.totalorder %s16, 1
    %p138 = por %p136, %p137
    %p140 = scmp.ne.s32.totalorder %s123, %s139
    %p141 = scmp.eq.s32.totalorder %s16, 0
    %p142 = por %p140, %p141
    %p143 = scmp.le.s32.totalorder 1, %s10
    %p144 = scmp.lt.s32.totalorder %s10, 3
    %p145 = pnand %p143, %p144
    %p146 = pneg %p145
    // Predicated region
    $region9: #{gearnet_forward.1} parent=5 // pred_check
      _
    $region10: #{gearnet_forward.1} parent=5 // pred_check_branch
      %148 = sbr.rel (%p145) target = $region12
    $region11: #{gearnet_forward.1} parent=5 // pred_region
      %s149 = ssub.s32 %s10, 1
      // Predicated region
      $region13: #{gearnet_forward.1} parent=11 // pred_check
        %p150 = pneg %p109
      $region14: #{gearnet_forward.1} parent=11 // pred_check_branch
        %152 = sbr.rel (%p150) target = $region16
      $region15: #{gearnet_forward.1} parent=11 // pred_region
        _
      $region16: #{gearnet_forward.1} parent=11 // pred_fallthru
        _
    $region12: #{gearnet_forward.1} parent=5 // pred_fallthru
      _
    %p153 = scmp.lt.s32.totalorder %s10, 2
    // Predicated region
    $region17: #{gearnet_forward.1} parent=5 // pred_check
      %p154 = pneg %p153
    $region18: #{gearnet_forward.1} parent=5 // pred_check_branch
      %156 = sbr.rel (%p154) target = $region20
    $region19: #{gearnet_forward.1} parent=5 // pred_region
      // Predicated region
      $region21: #{gearnet_forward.1} parent=19 // pred_check
        %p157 = pneg %p30
      $region22: #{gearnet_forward.1} parent=19 // pred_check_branch
        %159 = sbr.rel (%p157) target = $region24
      $region23: #{gearnet_forward.1} parent=19 // pred_region
        %p160 = scmp.lt.s32.totalorder %s10, 1
        %s161 = scalar_select %p160, %s10, 1
        %s162 = smul.addr %s161, 4
        %s163 = smul.addr %s162, 8
        %s164 = scalar_lea.vmem %s0, %s163
      $region24: #{gearnet_forward.1} parent=19 // pred_fallthru
        _
      // Predicated region
      $region25: #{gearnet_forward.1} parent=19 // pred_check
        %p165 = pneg %p56
      $region26: #{gearnet_forward.1} parent=19 // pred_check_branch
        %167 = sbr.rel (%p165) target = $region28
      $region27: #{gearnet_forward.1} parent=19 // pred_region
        %p168 = scmp.lt.s32.totalorder %s10, 1
        %s169 = scalar_select %p168, %s10, 1
        %s170 = smul.addr %s169, 8
        %s171 = scalar_lea.vmem %s1, %s170
      $region28: #{gearnet_forward.1} parent=19 // pred_fallthru
        _
      // Predicated region
      $region29: #{gearnet_forward.1} parent=19 // pred_check
        %p172 = pneg %p82
      $region30: #{gearnet_forward.1} parent=19 // pred_check_branch
        %174 = sbr.rel (%p172) target = $region32
      $region31: #{gearnet_forward.1} parent=19 // pred_region
        %p175 = scmp.lt.s32.totalorder %s10, 1
        %s176 = scalar_select %p175, %s10, 1
        %s177 = scalar_lea.vmem %s2, %s176
      $region32: #{gearnet_forward.1} parent=19 // pred_fallthru
        _
    $region20: #{gearnet_forward.1} parent=5 // pred_fallthru
      _
    %p178 = scmp.le.s32.totalorder 1, %s10
    %p179 = scmp.lt.s32.totalorder %s10, 3
    %p180 = pnand %p178, %p179
    %p181 = pneg %p180
    // Predicated region
    $region33: #{gearnet_forward.1} parent=5 // pred_check
      _
    $region34: #{gearnet_forward.1} parent=5 // pred_check_branch
      %183 = sbr.rel (%p180) target = $region36
    $region35: #{gearnet_forward.1} parent=5 // pred_region
      %s184 = ssub.s32 %s10, 1
      %p185 = scmp.lt.s32.totalorder %s15, 1
      %s186 = scalar_select %p185, %s15, 1
      %s187 = smul.addr %s186, 4
      %s188 = smul.addr %s187, 8
      %s189 = scalar_lea.vmem %s0, %s188
      %p190 = pneg %p36
      %p191 = pneg %p33
      %p192 = scmp.lt.s32.totalorder %s15, 1
      %s193 = scalar_select %p192, %s15, 1
      %s194 = smul.addr %s193, 8
      %s195 = scalar_lea.vmem %s1, %s194
      %p196 = pneg %p62
      %p197 = pneg %p59
      %p198 = scmp.lt.s32.totalorder %s15, 1
      %s199 = scalar_select %p198, %s15, 1
      %s200 = scalar_lea.vmem %s2, %s199
      %p201 = pneg %p88
      %p202 = pneg %p85
      %p203 = pneg %p109
      %p204 = pneg %p106
      %p205 = pneg %p135
      %p206 = pneg %p132
      %p207 = scmp.lt.s32.totalorder %s15, 1
      %s208 = scalar_select %p207, %s15, 1
      %s209 = smul.addr %s208, 8
      %s210 = scalar_lea.vmem %s4, %s209
      %p211 = scmp.lt.s32.totalorder %s15, 1
      %s212 = scalar_select %p211, %s15, 1
      %s213 = smul.addr %s212, 4
      %s214 = smul.addr %s213, 8
      %s215 = scalar_lea.vmem %s0, %s214
      %p216 = scmp.lt.s32.totalorder %s15, 1
      %s217 = scalar_select %p216, %s15, 1
      %s218 = smul.addr %s217, 8
      %s219 = scalar_lea.vmem %s1, %s218
      %p220 = scmp.lt.s32.totalorder %s15, 1
      %s221 = scalar_select %p220, %s15, 1
      %s222 = scalar_lea.vmem %s2, %s221
      %p223 = scmp.lt.s32.totalorder %s15, 1
      %s224 = scalar_select %p223, %s15, 1
      %s225 = smul.addr %s224, 8
      %s226 = scalar_lea.vmem %s4, %s225
      %v227 = vld [vmem:[%s215] sm:$0xff]
      %v228 = vld [vmem:[%s215 + $0x8] sm:$0xff]
      %v229 = vld [vmem:[%s215 + $0x10] sm:$0xff]
      %v230 = vld [vmem:[%s215 + $0x18] sm:$0xff]
      %v231 = vld [vmem:[%s219] sm:$0xff]
      %vm232 = vcmask 64512
      %v234 = vsel %vm232, %v227, 0
      %v237 = vsel %vm232, %v228, 0
      %v240 = vsel %vm232, %v229, 0
      %v243 = vsel %vm232, %v230, 0
      %245 = vmatprep.subr.mxu0 0.0
      %246 = vmatpush1.msra.mxu0 %v231
      %247 = vmatprep.subr.mxu0 0.0
      %248 = vmatpush1.msra.mxu0 0.0
      %249 = vmatprep.subr.mxu0 0.0
      %250 = vmatpush1.msra.mxu0 0.0
      %251 = vmatprep.subr.mxu0 0.0
      %252 = vmatpush1.msra.mxu0 0.0
      %253 = vmatprep.subr.mxu0 0.0
      %254 = vmatpush1.msra.mxu0 0.0
      %255 = vmatprep.subr.mxu0 0.0
      %256 = vmatpush1.msra.mxu0 0.0
      %257 = vmatprep.subr.mxu0 0.0
      %258 = vmatpush1.msra.mxu0 0.0
      %259 = vmatprep.subr.mxu0 0.0
      %260 = vmatpush1.msra.mxu0 0.0
      %261 = vmatprep.subr.mxu0 0.0
      %262 = vmatpush1.msra.mxu0 0.0
      %263 = vmatprep.subr.mxu0 0.0
      %264 = vmatpush1.msra.mxu0 0.0
      %265 = vmatprep.subr.mxu0 0.0
      %266 = vmatpush1.msra.mxu0 0.0
      %267 = vmatprep.subr.mxu0 0.0
      %268 = vmatpush1.msra.mxu0 0.0
      %269 = vmatprep.subr.mxu0 0.0
      %270 = vmatpush1.msra.mxu0 0.0
      %271 = vmatprep.subr.mxu0 0.0
      %272 = vmatpush1.msra.mxu0 0.0
      %273 = vmatprep.subr.mxu0 0.0
      %274 = vmatpush1.msra.mxu0 0.0
      %275 = vmatprep.subr.mxu0 0.0
      %276 = vmatpush1.msra.mxu0 0.0
      %277 = vmatprep.subr.mxu0 0.0
      %278 = vmatpush1.msra.mxu0 0.0
      %279 = vmatprep.subr.mxu0 0.0
      %280 = vmatpush1.msra.mxu0 0.0
      %281 = vmatprep.subr.mxu0 0.0
      %282 = vmatpush1.msra.mxu0 0.0
      %283 = vmatprep.subr.mxu0 0.0
      %284 = vmatpush1.msra.mxu0 0.0
      %285 = vmatprep.subr.mxu0 0.0
      %286 = vmatpush1.msra.mxu0 0.0
      %287 = vmatprep.subr.mxu0 0.0
      %288 = vmatpush1.msra.mxu0 0.0
      %289 = vmatprep.subr.mxu0 0.0
      %290 = vmatpush1.msra.mxu0 0.0
      %291 = vmatprep.subr.mxu0 0.0
      %292 = vmatpush1.msra.mxu0 0.0
      %293 = vmatprep.subr.mxu0 0.0
      %294 = vmatpush1.msra.mxu0 0.0
      %295 = vmatprep.subr.mxu0 0.0
      %296 = vmatpush1.msra.mxu0 0.0
      %297 = vmatprep.subr.mxu0 0.0
      %298 = vmatpush1.msra.mxu0 0.0
      %299 = vmatprep.subr.mxu0 0.0
      %300 = vmatpush1.msra.mxu0 0.0
      %301 = vmatprep.subr.mxu0 0.0
      %302 = vmatpush1.msra.mxu0 0.0
      %303 = vmatprep.subr.mxu0 0.0
      %304 = vmatpush1.msra.mxu0 0.0
      %305 = vmatprep.subr.mxu0 0.0
      %306 = vmatpush1.msra.mxu0 0.0
      %307 = vmatprep.subr.mxu0 0.0
      %308 = vmatpush1.msra.mxu0 0.0
      %309 = vmatprep.mubr.f32.mxu0 0.0
      %310 = vmatmul.mubr.f32.gmra.mrb[0].mxu0 %v234
      %v311 = vpop.f32.mrb[0].mxu0
      %v312 = vadd.f32 0.0, %v311
      %v313 = vpop.f32.mrb[0].mxu0
      %314 = vmatprep.mubr.f32.mxu0 0.0
      %315 = vmatmul.mubr.f32.gmra.mrb[0].mxu0 %v237
      %v316 = vpop.f32.mrb[0].mxu0
      %v317 = vadd.f32 0.0, %v316
      %v318 = vpop.f32.mrb[0].mxu0
      %319 = vmatprep.mubr.f32.mxu0 0.0
      %320 = vmatmul.mubr.f32.gmra.mrb[0].mxu0 %v240
      %v321 = vpop.f32.mrb[0].mxu0
      %v322 = vadd.f32 0.0, %v321
      %v323 = vpop.f32.mrb[0].mxu0
      %324 = vmatprep.mubr.f32.mxu0 0.0
      %325 = vmatmul.mubr.f32.gmra.mrb[0].mxu0 %v243
      %v326 = vpop.f32.mrb[0].mxu0
      %v327 = vadd.f32 0.0, %v326
      %v328 = vpop.f32.mrb[0].mxu0
      %329 = vdwg.mxu0
      %331 = vrot.lane.b32.xlu0 %v317, 8
      %v332 = vpop.permute.xlu0 %331
      %335 = vrot.lane.b32.xlu0 %v322, 16
      %v336 = vpop.permute.xlu0 %335
      %339 = vrot.lane.b32.xlu0 %v327, 24
      %v340 = vpop.permute.xlu0 %339
      %343 = vrot.lane.b32.xlu0 %v231, 32
      %v344 = vpop.permute.xlu0 %343
      %v346 = vsel %vm232, %v312, %v332
      %vm347 = vcmask 130048
      %v348 = vsel %vm347, %v346, %v336
      %vm349 = vcmask 195584
      %v350 = vsel %vm349, %v348, %v340
      %vm351 = vcmask 261120
      %v352 = vsel %vm351, %v350, %v344
      %v353 = vld [vmem:[%s3] sm:$0xff]
      %v354 = vld [vmem:[%s3 + $0x8] sm:$0xff]
      %v355 = vld [vmem:[%s3 + $0x10] sm:$0xff]
      %v356 = vld [vmem:[%s3 + $0x18] sm:$0xff]
      %v357 = vld [vmem:[%s3 + $0x20] sm:$0xff]
      %v358 = vld [vmem:[%s3 + $0x28] sm:$0x1]
      %v359 = vlaneseq
      %v360 = vshrl.u32 %v359, 7
      %v361 = vsub.s32 0, %v360
      %v362 = vrot.slane %v358, %v361
      %vm363 = vcmask 326656
      %v365 = vsel %vm363, %v352, 0
      %367 = vmatprep.subr.mxu0 0.0
      %368 = vmatpush1.msra.mxu0 %v353
      %369 = vmatprep.subr.mxu0 0.0
      %370 = vmatpush1.msra.mxu0 %v354
      %371 = vmatprep.subr.mxu0 0.0
      %372 = vmatpush1.msra.mxu0 %v355
      %373 = vmatprep.subr.mxu0 0.0
      %374 = vmatpush1.msra.mxu0 %v356
      %375 = vmatprep.subr.mxu0 0.0
      %376 = vmatpush1.msra.mxu0 %v357
      %377 = vmatprep.subr.mxu0 0.0
      %378 = vmatpush1.msra.mxu0 0.0
      %379 = vmatprep.subr.mxu0 0.0
      %380 = vmatpush1.msra.mxu0 0.0
      %381 = vmatprep.subr.mxu0 0.0
      %382 = vmatpush1.msra.mxu0 0.0
      %383 = vmatprep.subr.mxu0 0.0
      %384 = vmatpush1.msra.mxu0 0.0
      %385 = vmatprep.subr.mxu0 0.0
      %386 = vmatpush1.msra.mxu0 0.0
      %387 = vmatprep.subr.mxu0 0.0
      %388 = vmatpush1.msra.mxu0 0.0
      %389 = vmatprep.subr.mxu0 0.0
      %390 = vmatpush1.msra.mxu0 0.0
      %391 = vmatprep.subr.mxu0 0.0
      %392 = vmatpush1.msra.mxu0 0.0
      %393 = vmatprep.subr.mxu0 0.0
      %394 = vmatpush1.msra.mxu0 0.0
      %395 = vmatprep.subr.mxu0 0.0
      %396 = vmatpush1.msra.mxu0 0.0
      %397 = vmatprep.subr.mxu0 0.0
      %398 = vmatpush1.msra.mxu0 0.0
      %399 = vmatprep.subr.mxu0 0.0
      %400 = vmatpush1.msra.mxu0 0.0
      %401 = vmatprep.subr.mxu0 0.0
      %402 = vmatpush1.msra.mxu0 0.0
      %403 = vmatprep.subr.mxu0 0.0
      %404 = vmatpush1.msra.mxu0 0.0
      %405 = vmatprep.subr.mxu0 0.0
      %406 = vmatpush1.msra.mxu0 0.0
      %407 = vmatprep.subr.mxu0 0.0
      %408 = vmatpush1.msra.mxu0 0.0
      %409 = vmatprep.subr.mxu0 0.0
      %410 = vmatpush1.msra.mxu0 0.0
      %411 = vmatprep.subr.mxu0 0.0
      %412 = vmatpush1.msra.mxu0 0.0
      %413 = vmatprep.subr.mxu0 0.0
      %414 = vmatpush1.msra.mxu0 0.0
      %415 = vmatprep.subr.mxu0 0.0
      %416 = vmatpush1.msra.mxu0 0.0
      %417 = vmatprep.subr.mxu0 0.0
      %418 = vmatpush1.msra.mxu0 0.0
      %419 = vmatprep.subr.mxu0 0.0
      %420 = vmatpush1.msra.mxu0 0.0
      %421 = vmatprep.subr.mxu0 0.0
      %422 = vmatpush1.msra.mxu0 0.0
      %423 = vmatprep.subr.mxu0 0.0
      %424 = vmatpush1.msra.mxu0 0.0
      %425 = vmatprep.subr.mxu0 0.0
      %426 = vmatpush1.msra.mxu0 0.0
      %427 = vmatprep.subr.mxu0 0.0
      %428 = vmatpush1.msra.mxu0 0.0
      %429 = vmatprep.subr.mxu0 0.0
      %430 = vmatpush1.msra.mxu0 0.0
      %431 = vmatprep.mubr.f32.mxu0 0.0
      %432 = vmatmul.mubr.f32.gmra.mrb[0].mxu0 %v365
      %v433 = vpop.f32.mrb[0].mxu0
      %v434 = vadd.f32 %v362, %v433
      %v435 = vpop.f32.mrb[0].mxu0
      %436 = vdwg.mxu0
      %v437 = vmax.f32 %v434, 0.0
      %438 = vmatprep.subr.mxu0 0.0
      %439 = vmatpush1.msra.mxu0 %v437
      %440 = vmatprep.subr.mxu0 0.0
      %441 = vmatpush1.msra.mxu0 0.0
      %442 = vmatprep.subr.mxu0 0.0
      %443 = vmatpush1.msra.mxu0 0.0
      %444 = vmatprep.subr.mxu0 0.0
      %445 = vmatpush1.msra.mxu0 0.0
      %446 = vmatprep.subr.mxu0 0.0
      %447 = vmatpush1.msra.mxu0 0.0
      %448 = vmatprep.subr.mxu0 0.0
      %449 = vmatpush1.msra.mxu0 0.0
      %450 = vmatprep.subr.mxu0 0.0
      %451 = vmatpush1.msra.mxu0 0.0
      %452 = vmatprep.subr.mxu0 0.0
      %453 = vmatpush1.msra.mxu0 0.0
      %454 = vmatprep.subr.mxu0 0.0
      %455 = vmatpush1.msra.mxu0 0.0
      %456 = vmatprep.subr.mxu0 0.0
      %457 = vmatpush1.msra.mxu0 0.0
      %458 = vmatprep.subr.mxu0 0.0
      %459 = vmatpush1.msra.mxu0 0.0
      %460 = vmatprep.subr.mxu0 0.0
      %461 = vmatpush1.msra.mxu0 0.0
      %462 = vmatprep.subr.mxu0 0.0
      %463 = vmatpush1.msra.mxu0 0.0
      %464 = vmatprep.subr.mxu0 0.0
      %465 = vmatpush1.msra.mxu0 0.0
      %466 = vmatprep.subr.mxu0 0.0
      %467 = vmatpush1.msra.mxu0 0.0
      %468 = vmatprep.subr.mxu0 0.0
      %469 = vmatpush1.msra.mxu0 0.0
      %470 = vmatprep.subr.mxu0 0.0
      %471 = vmatpush1.msra.mxu0 0.0
      %472 = vmatprep.subr.mxu0 0.0
      %473 = vmatpush1.msra.mxu0 0.0
      %474 = vmatprep.subr.mxu0 0.0
      %475 = vmatpush1.msra.mxu0 0.0
      %476 = vmatprep.subr.mxu0 0.0
      %477 = vmatpush1.msra.mxu0 0.0
      %478 = vmatprep.subr.mxu0 0.0
      %479 = vmatpush1.msra.mxu0 0.0
      %480 = vmatprep.subr.mxu0 0.0
      %481 = vmatpush1.msra.mxu0 0.0
      %482 = vmatprep.subr.mxu0 0.0
      %483 = vmatpush1.msra.mxu0 0.0
      %484 = vmatprep.subr.mxu0 0.0
      %485 = vmatpush1.msra.mxu0 0.0
      %486 = vmatprep.subr.mxu0 0.0
      %487 = vmatpush1.msra.mxu0 0.0
      %488 = vmatprep.subr.mxu0 0.0
      %489 = vmatpush1.msra.mxu0 0.0
      %490 = vmatprep.subr.mxu0 0.0
      %491 = vmatpush1.msra.mxu0 0.0
      %492 = vmatprep.subr.mxu0 0.0
      %493 = vmatpush1.msra.mxu0 0.0
      %494 = vmatprep.subr.mxu0 0.0
      %495 = vmatpush1.msra.mxu0 0.0
      %496 = vmatprep.subr.mxu0 0.0
      %497 = vmatpush1.msra.mxu0 0.0
      %498 = vmatprep.subr.mxu0 0.0
      %499 = vmatpush1.msra.mxu0 0.0
      %500 = vmatprep.subr.mxu0 0.0
      %501 = vmatpush1.msra.mxu0 0.0
      %502 = vmatprep.mubr.f32.mxu0 0.0
      %503 = vmatmul.mubr.f32.gmra.mrb[0].mxu0 %v234
      %v504 = vpop.f32.mrb[0].mxu0
      %v505 = vadd.f32 0.0, %v504
      %v506 = vpop.f32.mrb[0].mxu0
      %507 = vmatprep.mubr.f32.mxu0 0.0
      %508 = vmatmul.mubr.f32.gmra.mrb[0].mxu0 %v237
      %v509 = vpop.f32.mrb[0].mxu0
      %v510 = vadd.f32 0.0, %v509
      %v511 = vpop.f32.mrb[0].mxu0
      %512 = vmatprep.mubr.f32.mxu0 0.0
      %513 = vmatmul.mubr.f32.gmra.mrb[0].mxu0 %v240
      %v514 = vpop.f32.mrb[0].mxu0
      %v515 = vadd.f32 0.0, %v514
      %v516 = vpop.f32.mrb[0].mxu0
      %517 = vmatprep.mubr.f32.mxu0 0.0
      %518 = vmatmul.mubr.f32.gmra.mrb[0].mxu0 %v243
      %v519 = vpop.f32.mrb[0].mxu0
      %v520 = vadd.f32 0.0, %v519
      %v521 = vpop.f32.mrb[0].mxu0
      %522 = vdwg.mxu0
      %524 = vrot.lane.b32.xlu0 %v510, 16
      %v525 = vpop.permute.xlu0 %524
      %528 = vrot.lane.b32.xlu0 %v515, 32
      %v529 = vpop.permute.xlu0 %528
      %532 = vrot.lane.b32.xlu0 %v520, 48
      %v533 = vpop.permute.xlu0 %532
      %536 = vrot.lane.b32.xlu0 %v437, 64
      %v537 = vpop.permute.xlu0 %536
      %v539 = vsel %vm347, %v505, %v525
      %v540 = vsel %vm351, %v539, %v529
      %vm541 = vcmask 392192
      %v542 = vsel %vm541, %v540, %v533
      %vm543 = vcmask 523264
      %v544 = vsel %vm543, %v542, %v537
      %v545 = vld [vmem:[%s3 + $0x30] sm:$0xff]
      %v546 = vld [vmem:[%s3 + $0x38] sm:$0xff]
      %v547 = vld [vmem:[%s3 + $0x40] sm:$0xff]
      %v548 = vld [vmem:[%s3 + $0x48] sm:$0xff]
      %v549 = vld [vmem:[%s3 + $0x50] sm:$0xff]
      %v550 = vld [vmem:[%s3 + $0x58] sm:$0xff]
      %v551 = vld [vmem:[%s3 + $0x60] sm:$0xff]
      %v552 = vld [vmem:[%s3 + $0x68] sm:$0xff]
      %v553 = vld [vmem:[%s3 + $0x70] sm:$0xff]
      %v554 = vld [vmem:[%s3 + $0x78] sm:$0xff]
      %v555 = vld [vmem:[%s3 + $0x80] sm:$0x1]
      %v556 = vlaneseq
      %v557 = vshrl.u32 %v556, 7
      %v558 = vsub.s32 0, %v557
      %v559 = vrot.slane %v555, %v558
      %vm560 = vcmask 654336
      %v562 = vsel %vm560, %v544, 0
      %564 = vmatprep.subr.mxu0 0.0
      %565 = vmatpush1.msra.mxu0 %v545
      %566 = vmatprep.subr.mxu0 0.0
      %567 = vmatpush1.msra.mxu0 %v546
      %568 = vmatprep.subr.mxu0 0.0
      %569 = vmatpush1.msra.mxu0 %v547
      %570 = vmatprep.subr.mxu0 0.0
      %571 = vmatpush1.msra.mxu0 %v548
      %572 = vmatprep.subr.mxu0 0.0
      %573 = vmatpush1.msra.mxu0 %v549
      %574 = vmatprep.subr.mxu0 0.0
      %575 = vmatpush1.msra.mxu0 %v550
      %576 = vmatprep.subr.mxu0 0.0
      %577 = vmatpush1.msra.mxu0 %v551
      %578 = vmatprep.subr.mxu0 0.0
      %579 = vmatpush1.msra.mxu0 %v552
      %580 = vmatprep.subr.mxu0 0.0
      %581 = vmatpush1.msra.mxu0 %v553
      %582 = vmatprep.subr.mxu0 0.0
      %583 = vmatpush1.msra.mxu0 %v554
      %584 = vmatprep.subr.mxu0 0.0
      %585 = vmatpush1.msra.mxu0 0.0
      %586 = vmatprep.subr.mxu0 0.0
      %587 = vmatpush1.msra.mxu0 0.0
      %588 = vmatprep.subr.mxu0 0.0
      %589 = vmatpush1.msra.mxu0 0.0
      %590 = vmatprep.subr.mxu0 0.0
      %591 = vmatpush1.msra.mxu0 0.0
      %592 = vmatprep.subr.mxu0 0.0
      %593 = vmatpush1.msra.mxu0 0.0
      %594 = vmatprep.subr.mxu0 0.0
      %595 = vmatpush1.msra.mxu0 0.0
      %596 = vmatprep.subr.mxu0 0.0
      %597 = vmatpush1.msra.mxu0 0.0
      %598 = vmatprep.subr.mxu0 0.0
      %599 = vmatpush1.msra.mxu0 0.0
      %600 = vmatprep.subr.mxu0 0.0
      %601 = vmatpush1.msra.mxu0 0.0
      %602 = vmatprep.subr.mxu0 0.0
      %603 = vmatpush1.msra.mxu0 0.0
      %604 = vmatprep.subr.mxu0 0.0
      %605 = vmatpush1.msra.mxu0 0.0
      %606 = vmatprep.subr.mxu0 0.0
      %607 = vmatpush1.msra.mxu0 0.0
      %608 = vmatprep.subr.mxu0 0.0
      %609 = vmatpush1.msra.mxu0 0.0
      %610 = vmatprep.subr.mxu0 0.0
      %611 = vmatpush1.msra.mxu0 0.0
      %612 = vmatprep.subr.mxu0 0.0
      %613 = vmatpush1.msra.mxu0 0.0
      %614 = vmatprep.subr.mxu0 0.0
      %615 = vmatpush1.msra.mxu0 0.0
      %616 = vmatprep.subr.mxu0 0.0
      %617 = vmatpush1.msra.mxu0 0.0
      %618 = vmatprep.subr.mxu0 0.0
      %619 = vmatpush1.msra.mxu0 0.0
      %620 = vmatprep.subr.mxu0 0.0
      %621 = vmatpush1.msra.mxu0 0.0
      %622 = vmatprep.subr.mxu0 0.0
      %623 = vmatpush1.msra.mxu0 0.0
      %624 = vmatprep.subr.mxu0 0.0
      %625 = vmatpush1.msra.mxu0 0.0
      %626 = vmatprep.subr.mxu0 0.0
      %627 = vmatpush1.msra.mxu0 0.0
      %628 = vmatprep.mubr.f32.mxu0 0.0
      %629 = vmatmul.mubr.f32.gmra.mrb[0].mxu0 %v562
      %v630 = vpop.f32.mrb[0].mxu0
      %v631 = vadd.f32 %v559, %v630
      %v632 = vpop.f32.mrb[0].mxu0
      %633 = vdwg.mxu0
      %v634 = vmax.f32 %v631, 0.0
      %v635 = vld [vmem:[%s222] sm:$0x1]
      %v637 = vsel %vm232, %v635, 0
      %639 = vmatprep.subr.mxu0 0.0
      %640 = vmatpush1.msra.mxu0 %v634
      %641 = vmatprep.subr.mxu0 0.0
      %642 = vmatpush1.msra.mxu0 0.0
      %643 = vmatprep.subr.mxu0 0.0
      %644 = vmatpush1.msra.mxu0 0.0
      %645 = vmatprep.subr.mxu0 0.0
      %646 = vmatpush1.msra.mxu0 0.0
      %647 = vmatprep.subr.mxu0 0.0
      %648 = vmatpush1.msra.mxu0 0.0
      %649 = vmatprep.subr.mxu0 0.0
      %650 = vmatpush1.msra.mxu0 0.0
      %651 = vmatprep.subr.mxu0 0.0
      %652 = vmatpush1.msra.mxu0 0.0
      %653 = vmatprep.subr.mxu0 0.0
      %654 = vmatpush1.msra.mxu0 0.0
      %655 = vmatprep.subr.mxu0 0.0
      %656 = vmatpush1.msra.mxu0 0.0
      %657 = vmatprep.subr.mxu0 0.0
      %658 = vmatpush1.msra.mxu0 0.0
      %659 = vmatprep.subr.mxu0 0.0
      %660 = vmatpush1.msra.mxu0 0.0
      %661 = vmatprep.subr.mxu0 0.0
      %662 = vmatpush1.msra.mxu0 0.0
      %663 = vmatprep.subr.mxu0 0.0
      %664 = vmatpush1.msra.mxu0 0.0
      %665 = vmatprep.subr.mxu0 0.0
      %666 = vmatpush1.msra.mxu0 0.0
      %667 = vmatprep.subr.mxu0 0.0
      %668 = vmatpush1.msra.mxu0 0.0
      %669 = vmatprep.subr.mxu0 0.0
      %670 = vmatpush1.msra.mxu0 0.0
      %671 = vmatprep.subr.mxu0 0.0
      %672 = vmatpush1.msra.mxu0 0.0
      %673 = vmatprep.subr.mxu0 0.0
      %674 = vmatpush1.msra.mxu0 0.0
      %675 = vmatprep.subr.mxu0 0.0
      %676 = vmatpush1.msra.mxu0 0.0
      %677 = vmatprep.subr.mxu0 0.0
      %678 = vmatpush1.msra.mxu0 0.0
      %679 = vmatprep.subr.mxu0 0.0
      %680 = vmatpush1.msra.mxu0 0.0
      %681 = vmatprep.subr.mxu0 0.0
      %682 = vmatpush1.msra.mxu0 0.0
      %683 = vmatprep.subr.mxu0 0.0
      %684 = vmatpush1.msra.mxu0 0.0
      %685 = vmatprep.subr.mxu0 0.0
      %686 = vmatpush1.msra.mxu0 0.0
      %687 = vmatprep.subr.mxu0 0.0
      %688 = vmatpush1.msra.mxu0 0.0
      %689 = vmatprep.subr.mxu0 0.0
      %690 = vmatpush1.msra.mxu0 0.0
      %691 = vmatprep.subr.mxu0 0.0
      %692 = vmatpush1.msra.mxu0 0.0
      %693 = vmatprep.subr.mxu0 0.0
      %694 = vmatpush1.msra.mxu0 0.0
      %695 = vmatprep.subr.mxu0 0.0
      %696 = vmatpush1.msra.mxu0 0.0
      %697 = vmatprep.subr.mxu0 0.0
      %698 = vmatpush1.msra.mxu0 0.0
      %699 = vmatprep.subr.mxu0 0.0
      %700 = vmatpush1.msra.mxu0 0.0
      %701 = vmatprep.subr.mxu0 0.0
      %702 = vmatpush1.msra.mxu0 0.0
      %703 = vmatprep.mubr.f32.mxu0 0.0
      %704 = vmatmul.mubr.f32.gmra.mrb[0].mxu0 %v637
      %v705 = vpop.f32.mrb[0].mxu0
      %v706 = vadd.f32 0.0, %v705
      %v707 = vpop.f32.mrb[0].mxu0
      %708 = vdwg.mxu0
      %v709 = vld [vmem:[%s3 + $0x88] sm:$0xff]
      %v710 = vld [vmem:[%s3 + $0x90] sm:$0xff]
      %v711 = vld [vmem:[%s3 + $0x98] sm:$0x1]
      %v713 = vsel %vm347, %v706, 0
      %715 = vmatprep.subr.mxu0 0.0
      %716 = vmatpush1.msra.mxu0 %v709
      %717 = vmatprep.subr.mxu0 0.0
      %718 = vmatpush1.msra.mxu0 %v710
      %719 = vmatprep.subr.mxu0 0.0
      %720 = vmatpush1.msra.mxu0 0.0
      %721 = vmatprep.subr.mxu0 0.0
      %722 = vmatpush1.msra.mxu0 0.0
      %723 = vmatprep.subr.mxu0 0.0
      %724 = vmatpush1.msra.mxu0 0.0
      %725 = vmatprep.subr.mxu0 0.0
      %726 = vmatpush1.msra.mxu0 0.0
      %727 = vmatprep.subr.mxu0 0.0
      %728 = vmatpush1.msra.mxu0 0.0
      %729 = vmatprep.subr.mxu0 0.0
      %730 = vmatpush1.msra.mxu0 0.0
      %731 = vmatprep.subr.mxu0 0.0
      %732 = vmatpush1.msra.mxu0 0.0
      %733 = vmatprep.subr.mxu0 0.0
      %734 = vmatpush1.msra.mxu0 0.0
      %735 = vmatprep.subr.mxu0 0.0
      %736 = vmatpush1.msra.mxu0 0.0
      %737 = vmatprep.subr.mxu0 0.0
      %738 = vmatpush1.msra.mxu0 0.0
      %739 = vmatprep.subr.mxu0 0.0
      %740 = vmatpush1.msra.mxu0 0.0
      %741 = vmatprep.subr.mxu0 0.0
      %742 = vmatpush1.msra.mxu0 0.0
      %743 = vmatprep.subr.mxu0 0.0
      %744 = vmatpush1.msra.mxu0 0.0
      %745 = vmatprep.subr.mxu0 0.0
      %746 = vmatpush1.msra.mxu0 0.0
      %747 = vmatprep.subr.mxu0 0.0
      %748 = vmatpush1.msra.mxu0 0.0
      %749 = vmatprep.subr.mxu0 0.0
      %750 = vmatpush1.msra.mxu0 0.0
      %751 = vmatprep.subr.mxu0 0.0
      %752 = vmatpush1.msra.mxu0 0.0
      %753 = vmatprep.subr.mxu0 0.0
      %754 = vmatpush1.msra.mxu0 0.0
      %755 = vmatprep.subr.mxu0 0.0
      %756 = vmatpush1.msra.mxu0 0.0
      %757 = vmatprep.subr.mxu0 0.0
      %758 = vmatpush1.msra.mxu0 0.0
      %759 = vmatprep.subr.mxu0 0.0
      %760 = vmatpush1.msra.mxu0 0.0
      %761 = vmatprep.subr.mxu0 0.0
      %762 = vmatpush1.msra.mxu0 0.0
      %763 = vmatprep.subr.mxu0 0.0
      %764 = vmatpush1.msra.mxu0 0.0
      %765 = vmatprep.subr.mxu0 0.0
      %766 = vmatpush1.msra.mxu0 0.0
      %767 = vmatprep.subr.mxu0 0.0
      %768 = vmatpush1.msra.mxu0 0.0
      %769 = vmatprep.subr.mxu0 0.0
      %770 = vmatpush1.msra.mxu0 0.0
      %771 = vmatprep.subr.mxu0 0.0
      %772 = vmatpush1.msra.mxu0 0.0
      %773 = vmatprep.subr.mxu0 0.0
      %774 = vmatpush1.msra.mxu0 0.0
      %775 = vmatprep.subr.mxu0 0.0
      %776 = vmatpush1.msra.mxu0 0.0
      %777 = vmatprep.subr.mxu0 0.0
      %778 = vmatpush1.msra.mxu0 0.0
      %779 = vmatprep.mubr.f32.mxu0 0.0
      %780 = vmatmul.mubr.f32.gmra.mrb[0].mxu0 %v713
      %v781 = vpop.f32.mrb[0].mxu0
      %v782 = vadd.f32 %v711, %v781
      %v783 = vpop.f32.mrb[0].mxu0
      %784 = vdwg.mxu0
      %v785 = vxor.u32 %v782, 2147483648
      %v786 = vmul.f32 %v785, 1.442695
      %v787 = vpow.pop %v786
      %v788 = vadd.f32 %v787, 1.0
      %v789 = vrcp.pop %v788
      %v790 = vmul.f32 1.0, %v789
      %v791 = vlaneseq
      %v792 = vshrl.u32 %v791, 7
      %v793 = vsub.s32 0, %v792
      %v794 = vrot.slane %v790, %v793
      %795 = vst [vmem:[%s226] sm:$0xff] %v794
      %p796 = scmp.lt.s32.totalorder %s15, 1
      %s797 = scalar_select %p796, %s15, 1
      %s798 = smul.addr %s797, 8
      %s799 = scalar_lea.vmem %s4, %s798
      // Predicated region
      $region37: #{gearnet_forward.1} parent=35 // pred_check
        %p800 = pneg %p132
      $region38: #{gearnet_forward.1} parent=35 // pred_check_branch
        %802 = sbr.rel (%p800) target = $region40
      $region39: #{gearnet_forward.1} parent=35 // pred_region
        _
      $region40: #{gearnet_forward.1} parent=35 // pred_fallthru
        _
    $region36: #{gearnet_forward.1} parent=5 // pred_fallthru
      _
    %p803 = scmp.le.s32.totalorder 2, %s10
    // Predicated region
    $region41: #{gearnet_forward.1} parent=5 // pred_check
      %p804 = pneg %p803
    $region42: #{gearnet_forward.1} parent=5 // pred_check_branch
      %806 = sbr.rel (%p804) target = $region44
    $region43: #{gearnet_forward.1} parent=5 // pred_region
      %s807 = ssub.s32 %s10, 2
      // Predicated region
      $region45: #{gearnet_forward.1} parent=43 // pred_check
        %p808 = pneg %p138
      $region46: #{gearnet_forward.1} parent=43 // pred_check_branch
        %810 = sbr.rel (%p808) target = $region48
      $region47: #{gearnet_forward.1} parent=43 // pred_region
        %p811 = scmp.lt.s32.totalorder %s16, 1
        %s812 = scalar_select %p811, %s16, 1
        %s813 = smul.addr %s812, 8
        %s814 = scalar_lea.vmem %s4, %s813
      $region48: #{gearnet_forward.1} parent=43 // pred_fallthru
        _
    $region44: #{gearnet_forward.1} parent=5 // pred_fallthru
      _
  $region6: #{gearnet_forward.1} parent=0 // loop_footer
    %s14 = sadd.s32 1, %s10
  $region7: #{gearnet_forward.1} parent=0 // loop_footer_branch
    %9 = sbr.rel target = $region3
  $region8: #{gearnet_forward.1} parent=0 // loop_exit
    _

</llo_original>
